<compile_context>
chip_gen: v7x
topology: tpu7x:2x2x1
jax: 0.10.0
libtpu: 0.0.40
codegen_flags: <defaults>
</compile_context>

<pallas_src>
import functools

import jax
import jax.numpy as jnp
from jax import lax
from jax.experimental import pallas as pl
from jax.experimental.pallas import tpu as pltpu


def _round_up(x, m):
    return ((x + m - 1) // m) * m


def _attention_block_kernel(x_ref, w_ref, b_ref, o_ref, *, d_valid, d_padded):
    """One row-tile: out = x * softmax(x @ W.T + b, axis=-1)."""
    x = x_ref[...]                                        # (tm, Dp), native dtype

    # PyTorch nn.Linear weight is (out, in): contract x's last dim with the
    # weight's last dim directly on the MXU (f32 accumulation), no transpose
    # materialization and no in-kernel weight cast.
    logits = lax.dot_general(
        x, w_ref[...],
        dimension_numbers=(((1,), (1,)), ((), ())),
        preferred_element_type=jnp.float32,
    ) + b_ref[...].astype(jnp.float32)                    # (tm, Dp) f32

    if d_valid != d_padded:
        # Mask padded feature columns out of the softmax.
        col = lax.broadcasted_iota(jnp.int32, (1, d_padded), 1)
        logits = jnp.where(col < d_valid, logits, jnp.float32(-1e30))

    # Numerically stable softmax over the last dim, fused into the gate.
    m = jnp.max(logits, axis=-1, keepdims=True)
    e = jnp.exp(logits - m)
    denom = jnp.sum(e, axis=-1, keepdims=True)
    inv = pl.reciprocal(denom, approx=True)               # EUP vrcp, ~free
    o_ref[...] = (x.astype(jnp.float32) * e * inv).astype(o_ref.dtype)


@functools.partial(jax.jit, static_argnames=("row_tile",))
def attention_block(x, weight, bias, *, row_tile=512):
    """x: (B, T, D); weight: (D, D) in PyTorch (out, in) layout; bias: (D,)."""
    B, T, D = x.shape
    assert weight.shape == (D, D) and bias.shape == (D,)
    n_rows = B * T

    # Lane-dense feature dim (multiple of 128) and dtype-aware row tiling.
    d_padded = _round_up(D, 128)
    itemsize = jnp.dtype(x.dtype).itemsize
    sublane = max(8, 32 // itemsize)                      # 8 f32, 16 bf16, 32 int8
    tile = max(sublane, min(row_tile, _round_up(n_rows, sublane)))
    tile = _round_up(tile, sublane)
    rows_padded = _round_up(n_rows, tile)
    grid = (rows_padded // tile,)

    x2d = x.reshape(n_rows, D)
    if rows_padded != n_rows or d_padded != D:
        x2d = jnp.pad(x2d, ((0, rows_padded - n_rows), (0, d_padded - D)))
    w = weight
    b2d = bias.reshape(1, D)
    if d_padded != D:
        w = jnp.pad(weight, ((0, d_padded - D), (0, d_padded - D)))
        b2d = jnp.pad(b2d, ((0, 0), (0, d_padded - D)))

    kernel = functools.partial(
        _attention_block_kernel, d_valid=D, d_padded=d_padded)

    # Scheduling hint for XLA.
    cost = pl.CostEstimate(
        flops=2 * rows_padded * d_padded * d_padded,
        transcendentals=rows_padded * d_padded,
        bytes_accessed=(2 * rows_padded * d_padded * itemsize          # x + out
                        + d_padded * d_padded * jnp.dtype(w.dtype).itemsize
                        + d_padded * jnp.dtype(b2d.dtype).itemsize),
    )

    # VMEM budget: resident (double-buffered) weight + double-buffered x/out
    # tiles + f32 intermediates, with headroom; clamped to v7x's 64 MiB physical.
    w_bytes = 2 * d_padded * d_padded * jnp.dtype(w.dtype).itemsize
    io_bytes = 2 * 2 * tile * d_padded * itemsize
    interm_bytes = 4 * tile * d_padded * 4
    vmem_limit = int(1.5 * (w_bytes + io_bytes + interm_bytes))
    vmem_limit = min(max(vmem_limit, 16 << 20), 64 << 20)

    out2d = pl.pallas_call(
        kernel,
        out_shape=jax.ShapeDtypeStruct((rows_padded, d_padded), x.dtype),
        grid_spec=pltpu.PrefetchScalarGridSpec(
            num_scalar_prefetch=0,
            grid=grid,
            in_specs=[
                pl.BlockSpec((tile, d_padded), lambda i: (i, 0)),       # x rows
                pl.BlockSpec((d_padded, d_padded), lambda i: (0, 0)),   # W resident
                pl.BlockSpec((1, d_padded), lambda i: (0, 0)),          # bias resident
            ],
            out_specs=pl.BlockSpec((tile, d_padded), lambda i: (i, 0)),
        ),
        compiler_params=pltpu.CompilerParams(
            dimension_semantics=("parallel",),
            vmem_limit_bytes=vmem_limit,
        ),
        cost_estimate=cost,
    )(x2d, w, b2d)

    return out2d[:n_rows, :D].reshape(B, T, D)


# TODO(synk): single_attention_vector=True path (mean over seq dim + repeat) is
# not implemented in-kernel; the module default (False) is what is reproduced.


def _reference(x, weight, bias):
    a = jnp.einsum("btd,od->bto", x, weight) + bias
    a = jax.nn.softmax(a, axis=-1)
    return x * a


if __name__ == "__main__":
    key = jax.random.PRNGKey(0)
    B, T, D = 2, 8, 32

    kx, kw, kb = jax.random.split(key, 3)
    x = jax.random.normal(kx, (B, T, D), dtype=jnp.float32)
    # Deterministic init mimicking nn.Linear default: U(-1/sqrt(D), 1/sqrt(D)).
    bound = 1.0 / jnp.sqrt(jnp.float32(D))
    weight = jax.random.uniform(kw, (D, D), jnp.float32, -bound, bound)
    bias = jax.random.uniform(kb, (D,), jnp.float32, -bound, bound)

    out = attention_block(x, weight, bias)
    out = jax.block_until_ready(out)

    ref = _reference(x, weight, bias)
    assert out.shape == (B, T, D)
    # approx=True reciprocal -> slightly relaxed tolerance (rel err ~1e-4).
    assert jnp.allclose(out, ref, atol=2e-3, rtol=2e-3), "mismatch vs reference"

    print("KERNEL_OK")
</pallas_src>

<mosaic_0001>
module attributes {stable_mosaic.version = 11 : i64} {
  func.func @_attention_block_kernel(%arg0: i32, %arg1: memref<16x128xf32, #tpu.memory_space<vmem>>, %arg2: memref<128x128xf32, #tpu.memory_space<vmem>>, %arg3: memref<1x128xf32, #tpu.memory_space<vmem>>, %arg4: memref<16x128xf32, #tpu.memory_space<vmem>>) attributes {dimension_semantics = [#tpu.dimension_semantics<parallel>], iteration_bounds = array<i64: 1>, scalar_prefetch = 0 : i64, scratch_operands = 0 : i64, tpu.core_type = #tpu.core_type<tc>, window_params = [{transform_indices = @transform_0, window_bounds = array<i64: 16, 128>}, {pipeline_mode = #tpu.pipeline_mode<synchronous>, transform_indices = @transform_1, window_bounds = array<i64: 128, 128>}, {pipeline_mode = #tpu.pipeline_mode<synchronous>, transform_indices = @transform_2, window_bounds = array<i64: 1, 128>}, {transform_indices = @transform_3, window_bounds = array<i64: 16, 128>}]} {
    %c0 = arith.constant 0 : index
    %c0_0 = arith.constant 0 : index
    %0 = vector.load %arg1[%c0, %c0_0] : memref<16x128xf32, #tpu.memory_space<vmem>>, vector<16x128xf32>
    %c0_1 = arith.constant 0 : index
    %c0_2 = arith.constant 0 : index
    %1 = vector.load %arg2[%c0_1, %c0_2] : memref<128x128xf32, #tpu.memory_space<vmem>>, vector<128x128xf32>
    %cst = arith.constant dense<0.000000e+00> : vector<16x128xf32>
    %2 = tpu.matmul %0, %1, %cst {dimension_numbers = #tpu.dot_dimension_numbers<[1], [1], [0], [0], [0, 0, 1, 0], [], []>} : vector<16x128xf32>, vector<128x128xf32>, vector<16x128xf32> -> vector<16x128xf32>
    %c0_3 = arith.constant 0 : index
    %c0_4 = arith.constant 0 : index
    %3 = vector.load %arg3[%c0_3, %c0_4] : memref<1x128xf32, #tpu.memory_space<vmem>>, vector<1x128xf32>
    %4 = vector.broadcast %3 : vector<1x128xf32> to vector<16x128xf32>
    %5 = arith.addf %2, %4 : vector<16x128xf32>
    %6 = tpu.iota {dimensions = array<i32: 1>} : vector<1x128xi32>
    %c32_i32 = arith.constant 32 : i32
    %7 = vector.broadcast %c32_i32 : i32 to vector<1x128xi32>
    %8 = arith.cmpi slt, %6, %7 : vector<1x128xi32>
    %cst_5 = arith.constant -1.000000e+30 : f32
    %9 = vector.shape_cast %8 : vector<1x128xi1> to vector<1x128xi1>
    %10 = vector.broadcast %9 : vector<1x128xi1> to vector<16x128xi1>
    %11 = vector.broadcast %cst_5 : f32 to vector<16x128xf32>
    %12 = arith.select %10, %5, %11 : vector<16x128xi1>, vector<16x128xf32>
    %cst_6 = arith.constant dense<0xFF800000> : vector<16xf32>
    %13 = vector.multi_reduction <maximumf>, %12, %cst_6 [1] : vector<16x128xf32> to vector<16xf32>
    %14 = vector.shape_cast %13 : vector<16xf32> to vector<16x1xf32>
    %15 = vector.broadcast %14 : vector<16x1xf32> to vector<16x128xf32>
    %16 = arith.subf %12, %15 : vector<16x128xf32>
    %17 = math.exp %16 : vector<16x128xf32>
    %cst_7 = arith.constant dense<0.000000e+00> : vector<16xf32>
    %18 = vector.multi_reduction <add>, %17, %cst_7 [1] : vector<16x128xf32> to vector<16xf32>
    %19 = vector.shape_cast %18 : vector<16xf32> to vector<16x1xf32>
    %20 = tpu.reciprocal %19 {approx = true} : vector<16x1xf32> -> vector<16x1xf32>
    %21 = arith.mulf %0, %17 : vector<16x128xf32>
    %22 = vector.broadcast %20 : vector<16x1xf32> to vector<16x128xf32>
    %23 = arith.mulf %21, %22 : vector<16x128xf32>
    %c0_8 = arith.constant 0 : index
    %c0_9 = arith.constant 0 : index
    %24 = vector.load %arg4[%c0_8, %c0_9] : memref<16x128xf32, #tpu.memory_space<vmem>>, vector<16x128xf32>
    tpu.vector_store %arg4[%c0_8, %c0_9], %23 {strides = array<i32>} : memref<16x128xf32, #tpu.memory_space<vmem>>, vector<16x128xf32>,
    return
  }
  func.func @transform_0(%arg0: i32) -> (i32, i32) {
    %c0_i32 = arith.constant 0 : i32
    %c0_i32_0 = arith.constant 0 : i32
    return %arg0, %c0_i32 : i32, i32
  }
  func.func @transform_1(%arg0: i32) -> (i32, i32) {
    %c0_i32 = arith.constant 0 : i32
    %c0_i32_0 = arith.constant 0 : i32
    %c0_i32_1 = arith.constant 0 : i32
    return %c0_i32, %c0_i32_0 : i32, i32
  }
  func.func @transform_2(%arg0: i32) -> (i32, i32) {
    %c0_i32 = arith.constant 0 : i32
    %c0_i32_0 = arith.constant 0 : i32
    %c0_i32_1 = arith.constant 0 : i32
    return %c0_i32, %c0_i32_0 : i32, i32
  }
  func.func @transform_3(%arg0: i32) -> (i32, i32) {
    %c0_i32 = arith.constant 0 : i32
    %c0_i32_0 = arith.constant 0 : i32
    return %arg0, %c0_i32 : i32, i32
  }
}

</mosaic_0001>

<llo_original>
// kernel: attention_block.1
$region0: #{attention_block.1}
  #allocation0 [shape = 'u32[]', space=smem, size = 0x4, offset = 0x4, fixed_abs, tag = 'smem constant byte address 0x4 - core index']
  #allocation1 [shape = 'u32[144,128]{1,0:T(1,128)}', space=vmem, size = 0x12000, scoped, tag = 'internal scratch']
  %s0 = inlined_call_operand.vmem [shape: f32[16,128], index: 0, kind: input, shape index: {}]
  %s1 = inlined_call_operand.vmem [shape: f32[128,128], index: 1, kind: input, shape index: {}]
  %s2 = inlined_call_operand.vmem [shape: f32[1,128], index: 2, kind: input, shape index: {}]
  %s3 = inlined_call_operand.vmem [shape: f32[16,128], index: 3, kind: output, shape index: {}]
  %s4 = sld [smem:[#allocation0]]
  $region22: #{attention_block.1} parent=0
    _
  %s6 = ssub.s32 1, %s4
  %s7 = scalar_select 0, %s6, %s4
  // Predicated region
  $region2: #{attention_block.1} parent=0 // pred_check
    _
  $region3: #{attention_block.1} parent=0 // pred_check_branch
    %9 = sbr.rel (0) target = $region5
  $region4: #{attention_block.1} parent=0 // pred_region
    _
  $region5: #{attention_block.1} parent=0 // pred_fallthru
    _
  // Predicated region
  $region6: #{attention_block.1} parent=0 // pred_check
    _
  $region7: #{attention_block.1} parent=0 // pred_check_branch
    %11 = sbr.rel (0) target = $region9
  $region8: #{attention_block.1} parent=0 // pred_region
    _
  $region9: #{attention_block.1} parent=0 // pred_fallthru
    _
  // Predicated region
  $region10: #{attention_block.1} parent=0 // pred_check
    _
  $region11: #{attention_block.1} parent=0 // pred_check_branch
    %13 = sbr.rel (0) target = $region13
  $region12: #{attention_block.1} parent=0 // pred_region
    _
  $region13: #{attention_block.1} parent=0 // pred_fallthru
    _
  %v14 = vld [vmem:[%s0] sm:$0xff]
  %v15 = vld [vmem:[%s0 + $0x8] sm:$0xff]
  %v16 = vld [vmem:[%s1] sm:$0xff]
  %v17 = vld [vmem:[%s1 + $0x8] sm:$0xff]
  %v18 = vld [vmem:[%s1 + $0x10] sm:$0xff]
  %v19 = vld [vmem:[%s1 + $0x18] sm:$0xff]
  %v20 = vld [vmem:[%s1 + $0x20] sm:$0xff]
  %v21 = vld [vmem:[%s1 + $0x28] sm:$0xff]
  %v22 = vld [vmem:[%s1 + $0x30] sm:$0xff]
  %v23 = vld [vmem:[%s1 + $0x38] sm:$0xff]
  %v24 = vld [vmem:[%s1 + $0x40] sm:$0xff]
  %v25 = vld [vmem:[%s1 + $0x48] sm:$0xff]
  %v26 = vld [vmem:[%s1 + $0x50] sm:$0xff]
  %v27 = vld [vmem:[%s1 + $0x58] sm:$0xff]
  %v28 = vld [vmem:[%s1 + $0x60] sm:$0xff]
  %v29 = vld [vmem:[%s1 + $0x68] sm:$0xff]
  %v30 = vld [vmem:[%s1 + $0x70] sm:$0xff]
  %v31 = vld [vmem:[%s1 + $0x78] sm:$0xff]
  %v32 = vld [vmem:[%s2] sm:$0x1]
  %v34 = vlaneseq
  %v35 = vshrl.u32 %v34, 7
  %v36 = vsub.s32 0, %v35
  %v37 = vrot.slane %v32, %v36
  %39 = vmatprep.subr.mxu0 0.0
  %40 = vmatpush1.xpose.msra.mxu0 %v16
  %41 = vmatprep.subr.mxu0 0.0
  %42 = vmatpush1.xpose.msra.mxu0 %v17
  %43 = vmatprep.subr.mxu0 0.0
  %44 = vmatpush1.xpose.msra.mxu0 %v18
  %45 = vmatprep.subr.mxu0 0.0
  %46 = vmatpush1.xpose.msra.mxu0 %v19
  %47 = vmatprep.subr.mxu0 0.0
  %48 = vmatpush1.xpose.msra.mxu0 %v20
  %49 = vmatprep.subr.mxu0 0.0
  %50 = vmatpush1.xpose.msra.mxu0 %v21
  %51 = vmatprep.subr.mxu0 0.0
  %52 = vmatpush1.xpose.msra.mxu0 %v22
  %53 = vmatprep.subr.mxu0 0.0
  %54 = vmatpush1.xpose.msra.mxu0 %v23
  %55 = vmatprep.subr.mxu0 0.0
  %56 = vmatpush1.xpose.msra.mxu0 %v24
  %57 = vmatprep.subr.mxu0 0.0
  %58 = vmatpush1.xpose.msra.mxu0 %v25
  %59 = vmatprep.subr.mxu0 0.0
  %60 = vmatpush1.xpose.msra.mxu0 %v26
  %61 = vmatprep.subr.mxu0 0.0
  %62 = vmatpush1.xpose.msra.mxu0 %v27
  %63 = vmatprep.subr.mxu0 0.0
  %64 = vmatpush1.xpose.msra.mxu0 %v28
  %65 = vmatprep.subr.mxu0 0.0
  %66 = vmatpush1.xpose.msra.mxu0 %v29
  %67 = vmatprep.subr.mxu0 0.0
  %68 = vmatpush1.xpose.msra.mxu0 %v30
  %69 = vmatprep.subr.mxu0 0.0
  %70 = vmatpush1.xpose.msra.mxu0 %v31
  %71 = vmatprep.subr.mxu0 0.0
  %72 = vmatpush1.xpose.msra.mxu0 0.0
  %73 = vmatprep.subr.mxu0 0.0
  %74 = vmatpush1.xpose.msra.mxu0 0.0
  %75 = vmatprep.subr.mxu0 0.0
  %76 = vmatpush1.xpose.msra.mxu0 0.0
  %77 = vmatprep.subr.mxu0 0.0
  %78 = vmatpush1.xpose.msra.mxu0 0.0
  %79 = vmatprep.subr.mxu0 0.0
  %80 = vmatpush1.xpose.msra.mxu0 0.0
  %81 = vmatprep.subr.mxu0 0.0
  %82 = vmatpush1.xpose.msra.mxu0 0.0
  %83 = vmatprep.subr.mxu0 0.0
  %84 = vmatpush1.xpose.msra.mxu0 0.0
  %85 = vmatprep.subr.mxu0 0.0
  %86 = vmatpush1.xpose.msra.mxu0 0.0
  %87 = vmatprep.subr.mxu0 0.0
  %88 = vmatpush1.xpose.msra.mxu0 0.0
  %89 = vmatprep.subr.mxu0 0.0
  %90 = vmatpush1.xpose.msra.mxu0 0.0
  %91 = vmatprep.subr.mxu0 0.0
  %92 = vmatpush1.xpose.msra.mxu0 0.0
  %93 = vmatprep.subr.mxu0 0.0
  %94 = vmatpush1.xpose.msra.mxu0 0.0
  %95 = vmatprep.subr.mxu0 0.0
  %96 = vmatpush1.xpose.msra.mxu0 0.0
  %97 = vmatprep.subr.mxu0 0.0
  %98 = vmatpush1.xpose.msra.mxu0 0.0
  %99 = vmatprep.subr.mxu0 0.0
  %100 = vmatpush1.xpose.msra.mxu0 0.0
  %101 = vmatprep.subr.mxu0 0.0
  %102 = vmatpush1.xpose.msra.mxu0 0.0
  %103 = vmatprep.mubr.f32.mxu0 0.0
  %104 = vmatmul.mubr.f32.gmra.mrb[0].mxu0 %v14
  %v105 = vpop.f32.mrb[0].mxu0
  %v106 = vadd.f32 %v37, %v105
  %v107 = vpop.f32.mrb[0].mxu0
  %108 = vmatprep.mubr.f32.mxu0 0.0
  %109 = vmatmul.mubr.f32.gmra.mrb[0].mxu0 %v15
  %v110 = vpop.f32.mrb[0].mxu0
  %v111 = vadd.f32 %v37, %v110
  %v112 = vpop.f32.mrb[0].mxu0
  %113 = vdwg.mxu0
  %v114 = vlaneseq
  %v115 = vand.u32 %v114, 127
  %vm116 = vcmp.lt.s32.totalorder %v115, 32
  %v117 = vsel %vm116, 1, 0
  %vm118 = vcmp.eq.s32.totalorder %v117, 1
  %v119 = vsel %vm118, %v106, -1e+30
  %v120 = vsel %vm118, %v111, -1e+30
  %121 = vmax.xlane.f32.xlu0 %v119
  %v122 = vpop.xlane.xlu0 %121
  %123 = vmax.xlane.f32.xlu0 %v120
  %v124 = vpop.xlane.xlu0 %123
  %v125 = vsub.f32 %v119, %v122
  %v126 = vsub.f32 %v120, %v124
  %v127 = vmul.f32 %v125, 1.442695
  %v128 = vpow.pop %v127
  %v129 = vmul.f32 %v126, 1.442695
  %v130 = vpow.pop %v129
  %131 = vadd.xlane.f32.xlu0 %v128
  %v132 = vpop.xlane.xlu0 %131
  %133 = vadd.xlane.f32.xlu0 %v130
  %v134 = vpop.xlane.xlu0 %133
  %v135 = vrcp.pop %v132
  %v136 = vrcp.pop %v134
  %v137 = vmul.f32 %v14, %v128
  %v138 = vmul.f32 %v15, %v130
  %v139 = vmul.f32 %v137, %v135
  %v140 = vmul.f32 %v138, %v136
  %141 = vst [vmem:[%s3] sm:$0xff] %v139
  %142 = vst [vmem:[%s3 + $0x8] sm:$0xff] %v140
  // Predicated region
  $region14: #{attention_block.1} parent=0 // pred_check
    _
  $region15: #{attention_block.1} parent=0 // pred_check_branch
    %144 = sbr.rel (0) target = $region17
  $region16: #{attention_block.1} parent=0 // pred_region
    _
  $region17: #{attention_block.1} parent=0 // pred_fallthru
    _
  // Predicated region
  $region18: #{attention_block.1} parent=0 // pred_check
    _
  $region19: #{attention_block.1} parent=0 // pred_check_branch
    %146 = sbr.rel (0) target = $region21
  $region20: #{attention_block.1} parent=0 // pred_region
    _
  $region21: #{attention_block.1} parent=0 // pred_fallthru
    _

</llo_original>
